<compile_context>
chip_gen: v6e
topology: v6e:2x2x1
jax: 0.10.0
libtpu: 0.0.40
codegen_flags: <defaults>
</compile_context>

<pallas_src>
import functools

import jax
import jax.numpy as jnp
from jax.experimental import pallas as pl
from jax.experimental.pallas import tpu as pltpu


# ----------------------------------------------------------------------------
# Pallas kernel: fused 2-layer LSTM over the whole sequence, time-chunked.
# grid = (num_chunks,)  (sequential / "arbitrary"); h, c for both layers are
# carried in VMEM scratch of shape (2, B, H).
# Gate columns are pre-ordered (i, f, o, g).
# ----------------------------------------------------------------------------
def _lstm2_kernel(x_ref, wih1_ref, whh1_ref, b1_ref,
                  wih2_ref, whh2_ref, b2_ref,
                  h0_ref, c0_ref,
                  y_ref, hT_ref, cT_ref,
                  h_sc, c_sc, *, hidden, chunk):
    ci = pl.program_id(0)

    @pl.when(ci == 0)
    def _():
        h_sc[...] = h0_ref[...]
        c_sc[...] = c0_ref[...]

    H = hidden

    def lstm_cell(x_in, h, c, wih, whh, b):
        gates = (jnp.dot(x_in, wih, preferred_element_type=jnp.float32)
                 + jnp.dot(h, whh, preferred_element_type=jnp.float32)
                 + b)                                  # (B, 4H), order (i,f,o,g)
        s = jax.nn.sigmoid(gates[:, :3 * H])           # one contiguous sigmoid slab
        g_g = jnp.tanh(gates[:, 3 * H:])
        i_g = s[:, :H]
        f_g = s[:, H:2 * H]
        o_g = s[:, 2 * H:3 * H]
        c_new = f_g * c + i_g * g_g
        h_new = o_g * jnp.tanh(c_new)
        return h_new, c_new

    def step(t, carry):
        x_t = x_ref[t]                                 # (B, I)
        h1, c1 = lstm_cell(x_t, h_sc[0], c_sc[0],
                           wih1_ref[...], whh1_ref[...], b1_ref[...])
        h_sc[0] = h1
        c_sc[0] = c1
        h2, c2 = lstm_cell(h1, h_sc[1], c_sc[1],
                           wih2_ref[...], whh2_ref[...], b2_ref[...])
        h_sc[1] = h2
        c_sc[1] = c2
        y_ref[t] = h2                                  # chunked writeback via BlockSpec
        return carry

    jax.lax.fori_loop(0, chunk, step, 0)

    @pl.when(ci == pl.num_programs(0) - 1)
    def _():
        hT_ref[...] = h_sc[...]
        cT_ref[...] = c_sc[...]


def _pick_chunk(seq_len, target=64):
    if seq_len <= target:
        return seq_len
    for c in range(target, 0, -1):
        if seq_len % c == 0:
            return c
    return seq_len


def lstm2_pallas(x_emb, layer1, layer2, h0, c0, *, chunk=None):
    """Fused 2-layer LSTM.

    x_emb:  (S, B, I) float32
    layerN: dict(wih_t=(in,4H), whh_t=(H,4H), bias=(1,4H)) gate order (i,f,o,g)
    h0,c0:  (2, B, H) float32
    returns: y (S, B, H), h_T (2, B, H), c_T (2, B, H)
    """
    S, B, I = x_emb.shape
    H = h0.shape[-1]
    if chunk is None:
        chunk = _pick_chunk(S)
    num_chunks = S // chunk
    kernel = functools.partial(_lstm2_kernel, hidden=H, chunk=chunk)
    return pl.pallas_call(
        kernel,
        out_shape=(jax.ShapeDtypeStruct((S, B, H), jnp.float32),
                   jax.ShapeDtypeStruct((2, B, H), jnp.float32),
                   jax.ShapeDtypeStruct((2, B, H), jnp.float32)),
        grid=(num_chunks,),
        in_specs=[
            pl.BlockSpec((chunk, B, I), lambda c: (c, 0, 0)),
            pl.BlockSpec((I, 4 * H), lambda c: (0, 0)),
            pl.BlockSpec((H, 4 * H), lambda c: (0, 0)),
            pl.BlockSpec((1, 4 * H), lambda c: (0, 0)),
            pl.BlockSpec((H, 4 * H), lambda c: (0, 0)),
            pl.BlockSpec((H, 4 * H), lambda c: (0, 0)),
            pl.BlockSpec((1, 4 * H), lambda c: (0, 0)),
            pl.BlockSpec((2, B, H), lambda c: (0, 0, 0)),
            pl.BlockSpec((2, B, H), lambda c: (0, 0, 0)),
        ],
        out_specs=(
            pl.BlockSpec((chunk, B, H), lambda c: (c, 0, 0)),
            pl.BlockSpec((2, B, H), lambda c: (0, 0, 0)),
            pl.BlockSpec((2, B, H), lambda c: (0, 0, 0)),
        ),
        scratch_shapes=[pltpu.VMEM((2, B, H), jnp.float32),
                        pltpu.VMEM((2, B, H), jnp.float32)],
        compiler_params=pltpu.CompilerParams(
            dimension_semantics=("arbitrary",),
            vmem_limit_bytes=64 * 1024 * 1024),
    )(x_emb, layer1["wih_t"], layer1["whh_t"], layer1["bias"],
      layer2["wih_t"], layer2["whh_t"], layer2["bias"], h0, c0)


# ----------------------------------------------------------------------------
# Pallas kernel: final linear projection, tiled over (rows, vocab).
# ----------------------------------------------------------------------------
def _linear_kernel(x_ref, w_ref, b_ref, o_ref):
    o_ref[...] = (jnp.dot(x_ref[...], w_ref[...],
                          preferred_element_type=jnp.float32)
                  + b_ref[...]).astype(o_ref.dtype)


def linear_pallas(x2d, w_t, bias, *, tn=256, tv=512):
    """x2d: (N, H), w_t: (H, V), bias: (1, V) -> (N, V)."""
    N, H = x2d.shape
    V = w_t.shape[-1]
    if N < tn or N % tn != 0:
        tn = N
    if V < tv or V % tv != 0:
        tv = V
    return pl.pallas_call(
        _linear_kernel,
        out_shape=jax.ShapeDtypeStruct((N, V), jnp.float32),
        grid=(N // tn, V // tv),
        in_specs=[
            pl.BlockSpec((tn, H), lambda i, j: (i, 0)),
            pl.BlockSpec((H, tv), lambda i, j: (0, j)),
            pl.BlockSpec((1, tv), lambda i, j: (0, j)),
        ],
        out_specs=pl.BlockSpec((tn, tv), lambda i, j: (i, j)),
        compiler_params=pltpu.CompilerParams(
            dimension_semantics=("parallel", "parallel"),
            vmem_limit_bytes=64 * 1024 * 1024),
    )(x2d, w_t, bias)


# ----------------------------------------------------------------------------
# Parameter init (PyTorch-default distributions) and one-time weight prep.
# ----------------------------------------------------------------------------
def init_params(key, vocabsize, embedding_dim, n_hidden, n_layers):
    params = {}
    keys = jax.random.split(key, 2 + 4 * n_layers + 2)
    ki = iter(keys)

    # nn.Embedding default init ~ N(0, 1)
    params["embedding"] = jax.random.normal(
        next(ki), (vocabsize, embedding_dim), dtype=jnp.float32)

    # nn.LSTM default init: uniform(-k, k), k = 1/sqrt(n_hidden)
    k = 1.0 / jnp.sqrt(jnp.float32(n_hidden))
    lstm = []
    for layer in range(n_layers):
        in_size = embedding_dim if layer == 0 else n_hidden
        wih = jax.random.uniform(next(ki), (4 * n_hidden, in_size),
                                 minval=-k, maxval=k, dtype=jnp.float32)
        whh = jax.random.uniform(next(ki), (4 * n_hidden, n_hidden),
                                 minval=-k, maxval=k, dtype=jnp.float32)
        bih = jax.random.uniform(next(ki), (4 * n_hidden,),
                                 minval=-k, maxval=k, dtype=jnp.float32)
        bhh = jax.random.uniform(next(ki), (4 * n_hidden,),
                                 minval=-k, maxval=k, dtype=jnp.float32)
        lstm.append(dict(wih=wih, whh=whh, bih=bih, bhh=bhh))
    params["lstm"] = lstm

    # nn.Linear default init: uniform(-kl, kl), kl = 1/sqrt(in_features)
    kl = 1.0 / jnp.sqrt(jnp.float32(n_hidden))
    params["lin_w"] = jax.random.uniform(next(ki), (vocabsize, n_hidden),
                                         minval=-kl, maxval=kl, dtype=jnp.float32)
    params["lin_b"] = jax.random.uniform(next(ki), (vocabsize,),
                                         minval=-kl, maxval=kl, dtype=jnp.float32)
    return params


def _reorder_gates(m, hidden):
    # PyTorch gate column order (i, f, g, o) -> kernel order (i, f, o, g)
    return jnp.concatenate(
        [m[..., :2 * hidden], m[..., 3 * hidden:4 * hidden],
         m[..., 2 * hidden:3 * hidden]], axis=-1)


def prepare_weights(params):
    """One-time weight prep: transpose, fuse biases, reorder gate columns."""
    n_hidden = params["lstm"][0]["whh"].shape[-1]
    prepped = {"embedding": params["embedding"]}
    layers = []
    for p in params["lstm"]:
        wih_t = _reorder_gates(jnp.transpose(p["wih"]), n_hidden)   # (in, 4H)
        whh_t = _reorder_gates(jnp.transpose(p["whh"]), n_hidden)   # (H, 4H)
        bias = _reorder_gates((p["bih"] + p["bhh"])[None, :], n_hidden)  # (1, 4H)
        layers.append(dict(wih_t=wih_t, whh_t=whh_t, bias=bias))
    prepped["lstm"] = layers
    prepped["lin_w_t"] = jnp.transpose(params["lin_w"])             # (H, V)
    prepped["lin_b"] = params["lin_b"][None, :]                     # (1, V)
    return prepped


# ----------------------------------------------------------------------------
# Forward.
# ----------------------------------------------------------------------------
def lstm_shakespeare_forward(prepped, x, hidden):
    """x: (S, B) int32 token ids; hidden = (h0, c0) each (n_layers, B, H)."""
    h0, c0 = hidden
    assert len(prepped["lstm"]) == 2, "fused kernel implements n_layers == 2"

    # Embedding gather (plain-JAX glue).
    # TODO(synk): fuse the gather into the LSTM kernel via scalar-prefetch row gather.
    embed = prepped["embedding"][x]                    # (S, B, D) float32

    y, h_n, c_n = lstm2_pallas(embed, prepped["lstm"][0], prepped["lstm"][1],
                               h0, c0)

    S, B, H = y.shape
    V = prepped["lin_w_t"].shape[-1]
    logits = linear_pallas(y.reshape(S * B, H),
                           prepped["lin_w_t"], prepped["lin_b"]).reshape(S, B, V)
    return logits, (h_n, c_n)


# ----------------------------------------------------------------------------
# Pure-JAX reference (for a correctness check), using the raw PyTorch-layout params.
# ----------------------------------------------------------------------------
def _reference_forward(params, x, hidden):
    h0, c0 = hidden
    embed = params["embedding"][x]
    inp = embed
    hs, cs = [], []
    for layer, p in enumerate(params["lstm"]):
        wih, whh, bih, bhh = p["wih"], p["whh"], p["bih"], p["bhh"]

        def step(carry, xt):
            h, c = carry
            gates = xt @ wih.T + bih + h @ whh.T + bhh
            i, f, g, o = jnp.split(gates, 4, axis=-1)
            i = jax.nn.sigmoid(i)
            f = jax.nn.sigmoid(f)
            g = jnp.tanh(g)
            o = jax.nn.sigmoid(o)
            c = f * c + i * g
            h = o * jnp.tanh(c)
            return (h, c), h

        (hT, cT), ys = jax.lax.scan(step, (h0[layer], c0[layer]), inp)
        inp = ys
        hs.append(hT)
        cs.append(cT)
    logits = inp @ params["lin_w"].T + params["lin_b"]
    return logits, (jnp.stack(hs), jnp.stack(cs))


if __name__ == "__main__":
    # Small shapes consistent with the module.
    vocabsize = 64
    embedding_dim = 8
    n_hidden = 32
    n_layers = 2
    seq_len = 8
    batch = 2

    key = jax.random.PRNGKey(0)
    k_params, k_x = jax.random.split(key)
    params = init_params(k_params, vocabsize, embedding_dim, n_hidden, n_layers)
    prepped = prepare_weights(params)      # one-time weight prep (not per-forward)

    x = jax.random.randint(k_x, (seq_len, batch), 0, vocabsize, dtype=jnp.int32)
    h0 = jnp.zeros((n_layers, batch, n_hidden), dtype=jnp.float32)
    c0 = jnp.zeros((n_layers, batch, n_hidden), dtype=jnp.float32)

    logits, (h_n, c_n) = lstm_shakespeare_forward(prepped, x, (h0, c0))
    jax.block_until_ready((logits, h_n, c_n))

    # Correctness check vs pure-JAX reference.
    ref_logits, (ref_h, ref_c) = _reference_forward(params, x, (h0, c0))
    assert logits.shape == (seq_len, batch, vocabsize)
    assert h_n.shape == (n_layers, batch, n_hidden)
    assert c_n.shape == (n_layers, batch, n_hidden)
    assert jnp.allclose(logits, ref_logits, atol=1e-4, rtol=1e-4)
    assert jnp.allclose(h_n, ref_h, atol=1e-4, rtol=1e-4)
    assert jnp.allclose(c_n, ref_c, atol=1e-4, rtol=1e-4)

    print("KERNEL_OK")
</pallas_src>

<mosaic_0001>
module attributes {stable_mosaic.version = 11 : i64} {
  func.func @_lstm2_kernel(%arg0: i32, %arg1: memref<8x2x8xf32, #tpu.memory_space<vmem>>, %arg2: memref<8x128xf32, #tpu.memory_space<vmem>>, %arg3: memref<32x128xf32, #tpu.memory_space<vmem>>, %arg4: memref<1x128xf32, #tpu.memory_space<vmem>>, %arg5: memref<32x128xf32, #tpu.memory_space<vmem>>, %arg6: memref<32x128xf32, #tpu.memory_space<vmem>>, %arg7: memref<1x128xf32, #tpu.memory_space<vmem>>, %arg8: memref<2x2x32xf32, #tpu.memory_space<vmem>>, %arg9: memref<2x2x32xf32, #tpu.memory_space<vmem>>, %arg10: memref<8x2x32xf32, #tpu.memory_space<vmem>>, %arg11: memref<2x2x32xf32, #tpu.memory_space<vmem>>, %arg12: memref<2x2x32xf32, #tpu.memory_space<vmem>>, %arg13: memref<2x2x32xf32, #tpu.memory_space<vmem>>, %arg14: memref<2x2x32xf32, #tpu.memory_space<vmem>>) attributes {dimension_semantics = [#tpu.dimension_semantics<arbitrary>], iteration_bounds = array<i64: 1>, scalar_prefetch = 0 : i64, scratch_operands = 2 : i64, tpu.core_type = #tpu.core_type<tc>, window_params = [{transform_indices = @transform_0, window_bounds = array<i64: 8, 2, 8>}, {pipeline_mode = #tpu.pipeline_mode<synchronous>, transform_indices = @transform_1, window_bounds = array<i64: 8, 128>}, {pipeline_mode = #tpu.pipeline_mode<synchronous>, transform_indices = @transform_2, window_bounds = array<i64: 32, 128>}, {pipeline_mode = #tpu.pipeline_mode<synchronous>, transform_indices = @transform_3, window_bounds = array<i64: 1, 128>}, {pipeline_mode = #tpu.pipeline_mode<synchronous>, transform_indices = @transform_4, window_bounds = array<i64: 32, 128>}, {pipeline_mode = #tpu.pipeline_mode<synchronous>, transform_indices = @transform_5, window_bounds = array<i64: 32, 128>}, {pipeline_mode = #tpu.pipeline_mode<synchronous>, transform_indices = @transform_6, window_bounds = array<i64: 1, 128>}, {pipeline_mode = #tpu.pipeline_mode<synchronous>, transform_indices = @transform_7, window_bounds = array<i64: 2, 2, 32>}, {pipeline_mode = #tpu.pipeline_mode<synchronous>, transform_indices = @transform_8, window_bounds = array<i64: 2, 2, 32>}, {transform_indices = @transform_9, window_bounds = array<i64: 8, 2, 32>}, {pipeline_mode = #tpu.pipeline_mode<synchronous>, transform_indices = @transform_10, window_bounds = array<i64: 2, 2, 32>}, {pipeline_mode = #tpu.pipeline_mode<synchronous>, transform_indices = @transform_11, window_bounds = array<i64: 2, 2, 32>}]} {
    %c0_i32 = arith.constant 0 : i32
    %0 = arith.cmpi eq, %arg0, %c0_i32 : i32
    %1 = arith.extui %0 : i1 to i32
    %c0_i32_0 = arith.constant 0 : i32
    %2 = arith.cmpi ne, %1, %c0_i32_0 : i32
    scf.if %2 {
      %c0 = arith.constant 0 : index
      %c0_5 = arith.constant 0 : index
      %c0_6 = arith.constant 0 : index
      %7 = vector.load %arg8[%c0, %c0_5, %c0_6] : memref<2x2x32xf32, #tpu.memory_space<vmem>>, vector<2x2x32xf32>
      %c0_7 = arith.constant 0 : index
      %c0_8 = arith.constant 0 : index
      %c0_9 = arith.constant 0 : index
      %8 = vector.load %arg13[%c0_7, %c0_8, %c0_9] : memref<2x2x32xf32, #tpu.memory_space<vmem>>, vector<2x2x32xf32>
      tpu.vector_store %arg13[%c0_7, %c0_8, %c0_9], %7 {strides = array<i32>} : memref<2x2x32xf32, #tpu.memory_space<vmem>>, vector<2x2x32xf32>,
      %c0_10 = arith.constant 0 : index
      %c0_11 = arith.constant 0 : index
      %c0_12 = arith.constant 0 : index
      %9 = vector.load %arg9[%c0_10, %c0_11, %c0_12] : memref<2x2x32xf32, #tpu.memory_space<vmem>>, vector<2x2x32xf32>
      %c0_13 = arith.constant 0 : index
      %c0_14 = arith.constant 0 : index
      %c0_15 = arith.constant 0 : index
      %10 = vector.load %arg14[%c0_13, %c0_14, %c0_15] : memref<2x2x32xf32, #tpu.memory_space<vmem>>, vector<2x2x32xf32>
      tpu.vector_store %arg14[%c0_13, %c0_14, %c0_15], %9 {strides = array<i32>} : memref<2x2x32xf32, #tpu.memory_space<vmem>>, vector<2x2x32xf32>,
    } else {
    }
    %c0_i32_1 = arith.constant 0 : i32
    %c8_i32 = arith.constant 8 : i32
    %3 = arith.addi %c0_i32_1, %c8_i32 : i32
    %c1_i32 = arith.constant 1 : i32
    scf.for %arg15 = %c0_i32_1 to %3 step %c1_i32  : i32 {
      %7 = arith.index_cast %arg15 : i32 to index
      %c0 = arith.constant 0 : index
      %c0_5 = arith.constant 0 : index
      %8 = vector.load %arg1[%7, %c0, %c0_5] : memref<8x2x8xf32, #tpu.memory_space<vmem>>, vector<1x2x8xf32>
      %9 = vector.shape_cast %8 : vector<1x2x8xf32> to vector<2x8xf32>
      %c0_6 = arith.constant 0 : index
      %c0_7 = arith.constant 0 : index
      %c0_8 = arith.constant 0 : index
      %10 = vector.load %arg13[%c0_6, %c0_7, %c0_8] : memref<2x2x32xf32, #tpu.memory_space<vmem>>, vector<1x2x32xf32>
      %11 = vector.shape_cast %10 : vector<1x2x32xf32> to vector<2x32xf32>
      %c0_9 = arith.constant 0 : index
      %c0_10 = arith.constant 0 : index
      %c0_11 = arith.constant 0 : index
      %12 = vector.load %arg14[%c0_9, %c0_10, %c0_11] : memref<2x2x32xf32, #tpu.memory_space<vmem>>, vector<1x2x32xf32>
      %13 = vector.shape_cast %12 : vector<1x2x32xf32> to vector<2x32xf32>
      %c0_12 = arith.constant 0 : index
      %c0_13 = arith.constant 0 : index
      %14 = vector.load %arg2[%c0_12, %c0_13] : memref<8x128xf32, #tpu.memory_space<vmem>>, vector<8x128xf32>
      %c0_14 = arith.constant 0 : index
      %c0_15 = arith.constant 0 : index
      %15 = vector.load %arg3[%c0_14, %c0_15] : memref<32x128xf32, #tpu.memory_space<vmem>>, vector<32x128xf32>
      %c0_16 = arith.constant 0 : index
      %c0_17 = arith.constant 0 : index
      %16 = vector.load %arg4[%c0_16, %c0_17] : memref<1x128xf32, #tpu.memory_space<vmem>>, vector<1x128xf32>
      %cst = arith.constant dense<0.000000e+00> : vector<2x128xf32>
      %17 = tpu.matmul %9, %14, %cst {dimension_numbers = #tpu.dot_dimension_numbers<[1], [0], [0], [1], [0, 0, 1, 1], [], []>} : vector<2x8xf32>, vector<8x128xf32>, vector<2x128xf32> -> vector<2x128xf32>
      %cst_18 = arith.constant dense<0.000000e+00> : vector<2x128xf32>
      %18 = tpu.matmul %11, %15, %cst_18 {dimension_numbers = #tpu.dot_dimension_numbers<[1], [0], [0], [1], [0, 0, 1, 1], [], []>} : vector<2x32xf32>, vector<32x128xf32>, vector<2x128xf32> -> vector<2x128xf32>
      %19 = arith.addf %17, %18 : vector<2x128xf32>
      %20 = vector.broadcast %16 : vector<1x128xf32> to vector<2x128xf32>
      %21 = arith.addf %19, %20 : vector<2x128xf32>
      %22 = vector.extract_strided_slice %21 {offsets = [0, 0], sizes = [2, 96], strides = [1, 1]} : vector<2x128xf32> to vector<2x96xf32>
      %23 = arith.negf %22 : vector<2x96xf32>
      %24 = math.exp %23 : vector<2x96xf32>
      %cst_19 = arith.constant 1.000000e+00 : f32
      %25 = vector.broadcast %cst_19 : f32 to vector<2x96xf32>
      %26 = arith.addf %25, %24 : vector<2x96xf32>
      %27 = arith.divf %25, %26 : vector<2x96xf32>
      %28 = vector.extract_strided_slice %21 {offsets = [0, 96], sizes = [2, 32], strides = [1, 1]} : vector<2x128xf32> to vector<2x32xf32>
      %29 = math.tanh %28 : vector<2x32xf32>
      %30 = vector.extract_strided_slice %27 {offsets = [0, 0], sizes = [2, 32], strides = [1, 1]} : vector<2x96xf32> to vector<2x32xf32>
      %31 = vector.extract_strided_slice %27 {offsets = [0, 32], sizes = [2, 32], strides = [1, 1]} : vector<2x96xf32> to vector<2x32xf32>
      %32 = vector.extract_strided_slice %27 {offsets = [0, 64], sizes = [2, 32], strides = [1, 1]} : vector<2x96xf32> to vector<2x32xf32>
      %33 = arith.mulf %31, %13 : vector<2x32xf32>
      %34 = arith.mulf %30, %29 : vector<2x32xf32>
      %35 = arith.addf %33, %34 : vector<2x32xf32>
      %36 = math.tanh %35 : vector<2x32xf32>
      %37 = arith.mulf %32, %36 : vector<2x32xf32>
      %c0_20 = arith.constant 0 : index
      %c0_21 = arith.constant 0 : index
      %c0_22 = arith.constant 0 : index
      %38 = vector.load %arg13[%c0_20, %c0_21, %c0_22] : memref<2x2x32xf32, #tpu.memory_space<vmem>>, vector<1x2x32xf32>
      %39 = vector.shape_cast %38 : vector<1x2x32xf32> to vector<2x32xf32>
      %40 = vector.shape_cast %37 : vector<2x32xf32> to vector<1x2x32xf32>
      tpu.vector_store %arg13[%c0_20, %c0_21, %c0_22], %40 {strides = array<i32>} : memref<2x2x32xf32, #tpu.memory_space<vmem>>, vector<1x2x32xf32>,
      %c0_23 = arith.constant 0 : index
      %c0_24 = arith.constant 0 : index
      %c0_25 = arith.constant 0 : index
      %41 = vector.load %arg14[%c0_23, %c0_24, %c0_25] : memref<2x2x32xf32, #tpu.memory_space<vmem>>, vector<1x2x32xf32>
      %42 = vector.shape_cast %41 : vector<1x2x32xf32> to vector<2x32xf32>
      %43 = vector.shape_cast %35 : vector<2x32xf32> to vector<1x2x32xf32>
      tpu.vector_store %arg14[%c0_23, %c0_24, %c0_25], %43 {strides = array<i32>} : memref<2x2x32xf32, #tpu.memory_space<vmem>>, vector<1x2x32xf32>,
      %c1 = arith.constant 1 : index
      %c0_26 = arith.constant 0 : index
      %c0_27 = arith.constant 0 : index
      %44 = vector.load %arg13[%c1, %c0_26, %c0_27] : memref<2x2x32xf32, #tpu.memory_space<vmem>>, vector<1x2x32xf32>
      %45 = vector.shape_cast %44 : vector<1x2x32xf32> to vector<2x32xf32>
      %c1_28 = arith.constant 1 : index
      %c0_29 = arith.constant 0 : index
      %c0_30 = arith.constant 0 : index
      %46 = vector.load %arg14[%c1_28, %c0_29, %c0_30] : memref<2x2x32xf32, #tpu.memory_space<vmem>>, vector<1x2x32xf32>
      %47 = vector.shape_cast %46 : vector<1x2x32xf32> to vector<2x32xf32>
      %c0_31 = arith.constant 0 : index
      %c0_32 = arith.constant 0 : index
      %48 = vector.load %arg5[%c0_31, %c0_32] : memref<32x128xf32, #tpu.memory_space<vmem>>, vector<32x128xf32>
      %c0_33 = arith.constant 0 : index
      %c0_34 = arith.constant 0 : index
      %49 = vector.load %arg6[%c0_33, %c0_34] : memref<32x128xf32, #tpu.memory_space<vmem>>, vector<32x128xf32>
      %c0_35 = arith.constant 0 : index
      %c0_36 = arith.constant 0 : index
      %50 = vector.load %arg7[%c0_35, %c0_36] : memref<1x128xf32, #tpu.memory_space<vmem>>, vector<1x128xf32>
      %cst_37 = arith.constant dense<0.000000e+00> : vector<2x128xf32>
      %51 = tpu.matmul %37, %48, %cst_37 {dimension_numbers = #tpu.dot_dimension_numbers<[1], [0], [0], [1], [0, 0, 1, 1], [], []>} : vector<2x32xf32>, vector<32x128xf32>, vector<2x128xf32> -> vector<2x128xf32>
      %cst_38 = arith.constant dense<0.000000e+00> : vector<2x128xf32>
      %52 = tpu.matmul %45, %49, %cst_38 {dimension_numbers = #tpu.dot_dimension_numbers<[1], [0], [0], [1], [0, 0, 1, 1], [], []>} : vector<2x32xf32>, vector<32x128xf32>, vector<2x128xf32> -> vector<2x128xf32>
      %53 = arith.addf %51, %52 : vector<2x128xf32>
      %54 = vector.broadcast %50 : vector<1x128xf32> to vector<2x128xf32>
      %55 = arith.addf %53, %54 : vector<2x128xf32>
      %56 = vector.extract_strided_slice %55 {offsets = [0, 0], sizes = [2, 96], strides = [1, 1]} : vector<2x128xf32> to vector<2x96xf32>
      %57 = arith.negf %56 : vector<2x96xf32>
      %58 = math.exp %57 : vector<2x96xf32>
      %cst_39 = arith.constant 1.000000e+00 : f32
      %59 = vector.broadcast %cst_39 : f32 to vector<2x96xf32>
      %60 = arith.addf %59, %58 : vector<2x96xf32>
      %61 = arith.divf %59, %60 : vector<2x96xf32>
      %62 = vector.extract_strided_slice %55 {offsets = [0, 96], sizes = [2, 32], strides = [1, 1]} : vector<2x128xf32> to vector<2x32xf32>
      %63 = math.tanh %62 : vector<2x32xf32>
      %64 = vector.extract_strided_slice %61 {offsets = [0, 0], sizes = [2, 32], strides = [1, 1]} : vector<2x96xf32> to vector<2x32xf32>
      %65 = vector.extract_strided_slice %61 {offsets = [0, 32], sizes = [2, 32], strides = [1, 1]} : vector<2x96xf32> to vector<2x32xf32>
      %66 = vector.extract_strided_slice %61 {offsets = [0, 64], sizes = [2, 32], strides = [1, 1]} : vector<2x96xf32> to vector<2x32xf32>
      %67 = arith.mulf %65, %47 : vector<2x32xf32>
      %68 = arith.mulf %64, %63 : vector<2x32xf32>
      %69 = arith.addf %67, %68 : vector<2x32xf32>
      %70 = math.tanh %69 : vector<2x32xf32>
      %71 = arith.mulf %66, %70 : vector<2x32xf32>
      %c1_40 = arith.constant 1 : index
      %c0_41 = arith.constant 0 : index
      %c0_42 = arith.constant 0 : index
      %72 = vector.load %arg13[%c1_40, %c0_41, %c0_42] : memref<2x2x32xf32, #tpu.memory_space<vmem>>, vector<1x2x32xf32>
      %73 = vector.shape_cast %72 : vector<1x2x32xf32> to vector<2x32xf32>
      %74 = vector.shape_cast %71 : vector<2x32xf32> to vector<1x2x32xf32>
      tpu.vector_store %arg13[%c1_40, %c0_41, %c0_42], %74 {strides = array<i32>} : memref<2x2x32xf32, #tpu.memory_space<vmem>>, vector<1x2x32xf32>,
      %c1_43 = arith.constant 1 : index
      %c0_44 = arith.constant 0 : index
      %c0_45 = arith.constant 0 : index
      %75 = vector.load %arg14[%c1_43, %c0_44, %c0_45] : memref<2x2x32xf32, #tpu.memory_space<vmem>>, vector<1x2x32xf32>
      %76 = vector.shape_cast %75 : vector<1x2x32xf32> to vector<2x32xf32>
      %77 = vector.shape_cast %69 : vector<2x32xf32> to vector<1x2x32xf32>
      tpu.vector_store %arg14[%c1_43, %c0_44, %c0_45], %77 {strides = array<i32>} : memref<2x2x32xf32, #tpu.memory_space<vmem>>, vector<1x2x32xf32>,
      %78 = arith.index_cast %arg15 : i32 to index
      %c0_46 = arith.constant 0 : index
      %c0_47 = arith.constant 0 : index
      %79 = vector.load %arg10[%78, %c0_46, %c0_47] : memref<8x2x32xf32, #tpu.memory_space<vmem>>, vector<1x2x32xf32>
      %80 = vector.shape_cast %79 : vector<1x2x32xf32> to vector<2x32xf32>
      %81 = vector.shape_cast %71 : vector<2x32xf32> to vector<1x2x32xf32>
      tpu.vector_store %arg10[%78, %c0_46, %c0_47], %81 {strides = array<i32>} : memref<8x2x32xf32, #tpu.memory_space<vmem>>, vector<1x2x32xf32>,
    }
    %c8_i32_2 = arith.constant 8 : i32
    %c0_i32_3 = arith.constant 0 : i32
    %4 = arith.cmpi eq, %arg0, %c0_i32_3 : i32
    %5 = arith.extui %4 : i1 to i32
    %c0_i32_4 = arith.constant 0 : i32
    %6 = arith.cmpi ne, %5, %c0_i32_4 : i32
    scf.if %6 {
      %c0 = arith.constant 0 : index
      %c0_5 = arith.constant 0 : index
      %c0_6 = arith.constant 0 : index
      %7 = vector.load %arg13[%c0, %c0_5, %c0_6] : memref<2x2x32xf32, #tpu.memory_space<vmem>>, vector<2x2x32xf32>
      %c0_7 = arith.constant 0 : index
      %c0_8 = arith.constant 0 : index
      %c0_9 = arith.constant 0 : index
      %8 = vector.load %arg11[%c0_7, %c0_8, %c0_9] : memref<2x2x32xf32, #tpu.memory_space<vmem>>, vector<2x2x32xf32>
      tpu.vector_store %arg11[%c0_7, %c0_8, %c0_9], %7 {strides = array<i32>} : memref<2x2x32xf32, #tpu.memory_space<vmem>>, vector<2x2x32xf32>,
      %c0_10 = arith.constant 0 : index
      %c0_11 = arith.constant 0 : index
      %c0_12 = arith.constant 0 : index
      %9 = vector.load %arg14[%c0_10, %c0_11, %c0_12] : memref<2x2x32xf32, #tpu.memory_space<vmem>>, vector<2x2x32xf32>
      %c0_13 = arith.constant 0 : index
      %c0_14 = arith.constant 0 : index
      %c0_15 = arith.constant 0 : index
      %10 = vector.load %arg12[%c0_13, %c0_14, %c0_15] : memref<2x2x32xf32, #tpu.memory_space<vmem>>, vector<2x2x32xf32>
      tpu.vector_store %arg12[%c0_13, %c0_14, %c0_15], %9 {strides = array<i32>} : memref<2x2x32xf32, #tpu.memory_space<vmem>>, vector<2x2x32xf32>,
    } else {
    }
    return
  }
  func.func @transform_0(%arg0: i32) -> (i32, i32, i32) {
    %c0_i32 = arith.constant 0 : i32
    %c0_i32_0 = arith.constant 0 : i32
    %c0_i32_1 = arith.constant 0 : i32
    return %arg0, %c0_i32, %c0_i32_0 : i32, i32, i32
  }
  func.func @transform_1(%arg0: i32) -> (i32, i32) {
    %c0_i32 = arith.constant 0 : i32
    %c0_i32_0 = arith.constant 0 : i32
    %c0_i32_1 = arith.constant 0 : i32
    return %c0_i32, %c0_i32_0 : i32, i32
  }
  func.func @transform_2(%arg0: i32) -> (i32, i32) {
    %c0_i32 = arith.constant 0 : i32
    %c0_i32_0 = arith.constant 0 : i32
    %c0_i32_1 = arith.constant 0 : i32
    return %c0_i32, %c0_i32_0 : i32, i32
  }
  func.func @transform_3(%arg0: i32) -> (i32, i32) {
    %c0_i32 = arith.constant 0 : i32
    %c0_i32_0 = arith.constant 0 : i32
    %c0_i32_1 = arith.constant 0 : i32
    return %c0_i32, %c0_i32_0 : i32, i32
  }
  func.func @transform_4(%arg0: i32) -> (i32, i32) {
    %c0_i32 = arith.constant 0 : i32
    %c0_i32_0 = arith.constant 0 : i32
    %c0_i32_1 = arith.constant 0 : i32
    return %c0_i32, %c0_i32_0 : i32, i32
  }
  func.func @transform_5(%arg0: i32) -> (i32, i32) {
    %c0_i32 = arith.constant 0 : i32
    %c0_i32_0 = arith.constant 0 : i32
    %c0_i32_1 = arith.constant 0 : i32
    return %c0_i32, %c0_i32_0 : i32, i32
  }
  func.func @transform_6(%arg0: i32) -> (i32, i32) {
    %c0_i32 = arith.constant 0 : i32
    %c0_i32_0 = arith.constant 0 : i32
    %c0_i32_1 = arith.constant 0 : i32
    return %c0_i32, %c0_i32_0 : i32, i32
  }
  func.func @transform_7(%arg0: i32) -> (i32, i32, i32) {
    %c0_i32 = arith.constant 0 : i32
    %c0_i32_0 = arith.constant 0 : i32
    %c0_i32_1 = arith.constant 0 : i32
    %c0_i32_2 = arith.constant 0 : i32
    return %c0_i32, %c0_i32_0, %c0_i32_1 : i32, i32, i32
  }
  func.func @transform_8(%arg0: i32) -> (i32, i32, i32) {
    %c0_i32 = arith.constant 0 : i32
    %c0_i32_0 = arith.constant 0 : i32
    %c0_i32_1 = arith.constant 0 : i32
    %c0_i32_2 = arith.constant 0 : i32
    return %c0_i32, %c0_i32_0, %c0_i32_1 : i32, i32, i32
  }
  func.func @transform_9(%arg0: i32) -> (i32, i32, i32) {
    %c0_i32 = arith.constant 0 : i32
    %c0_i32_0 = arith.constant 0 : i32
    %c0_i32_1 = arith.constant 0 : i32
    return %arg0, %c0_i32, %c0_i32_0 : i32, i32, i32
  }
  func.func @transform_10(%arg0: i32) -> (i32, i32, i32) {
    %c0_i32 = arith.constant 0 : i32
    %c0_i32_0 = arith.constant 0 : i32
    %c0_i32_1 = arith.constant 0 : i32
    %c0_i32_2 = arith.constant 0 : i32
    return %c0_i32, %c0_i32_0, %c0_i32_1 : i32, i32, i32
  }
  func.func @transform_11(%arg0: i32) -> (i32, i32, i32) {
    %c0_i32 = arith.constant 0 : i32
    %c0_i32_0 = arith.constant 0 : i32
    %c0_i32_1 = arith.constant 0 : i32
    %c0_i32_2 = arith.constant 0 : i32
    return %c0_i32, %c0_i32_0, %c0_i32_1 : i32, i32, i32
  }
}

</mosaic_0001>

<llo_original>
// kernel: tpu_custom_call.1
$region0: #{tpu_custom_call.1}
  #allocation0 [shape = 'u32[]', space=smem, size = 0x4, offset = 0x4, fixed_abs, tag = 'smem constant byte address 0x4 - core index']
  #allocation1 [shape = 'u32[144,128]{1,0:T(1,128)}', space=vmem, size = 0x12000, scoped, tag = 'internal scratch']
  #allocation2 [shape = 'f32[2,2,32]{2,1,0:T(2,128)}', space=vmem, size = 0x800, scoped, tag = 'scratch operand']
  #allocation3 [shape = 'f32[2,2,32]{2,1,0:T(2,128)}', space=vmem, size = 0x800, scoped, tag = 'scratch operand']
  %s0 = inlined_call_operand.hbm [shape: f32[8,2,8], index: 0, kind: input, shape index: {}]
  %s1 = inlined_call_operand.hbm [shape: f32[8,128], index: 1, kind: input, shape index: {}]
  %s2 = inlined_call_operand.hbm [shape: f32[32,128], index: 2, kind: input, shape index: {}]
  %s3 = inlined_call_operand.vmem [shape: f32[1,128], index: 3, kind: input, shape index: {}]
  %s4 = inlined_call_operand.hbm [shape: f32[32,128], index: 4, kind: input, shape index: {}]
  %s5 = inlined_call_operand.hbm [shape: f32[32,128], index: 5, kind: input, shape index: {}]
  %s6 = inlined_call_operand.vmem [shape: f32[1,128], index: 6, kind: input, shape index: {}]
  %s7 = inlined_call_operand.vmem [shape: f32[2,2,32], index: 7, kind: input, shape index: {}]
  %s8 = inlined_call_operand.vmem [shape: f32[2,2,32], index: 8, kind: input, shape index: {}]
  %s9 = inlined_call_operand.hbm [shape: f32[8,2,32], index: 9, kind: output, shape index: {0}]
  %s10 = inlined_call_operand.hbm [shape: f32[2,2,32], index: 10, kind: output, shape index: {1}]
  %s11 = inlined_call_operand.hbm [shape: f32[2,2,32], index: 11, kind: output, shape index: {2}]
  %12 = xla_tuple %s9, %s10, %s11
  %s13 = sld [smem:[#allocation0]]
  $region97: #{tpu_custom_call.1} parent=0
    _
  %s15 = ssub.s32 1, %s13
  %s16 = scalar_select 0, %s15, %s13
  $region1: #{tpu_custom_call.1} parent=0
    #allocation4 [shape = 'u8[8192]{0}', space=vmem, size = 0x2000, scoped, tag = 'input window, operand 0, single buffered']
    #allocation5 [shape = 's32[1]{0}', space=sflag, size = 0x4, scoped, tag = 'scoped memory for tpu_custom_call.1']
    #allocation6 [shape = 's32[1]{0}', space=sflag, size = 0x4, scoped, tag = 'scoped memory for tpu_custom_call.1']
    #allocation7 [shape = 'u8[4096]{0}', space=vmem, size = 0x1000, scoped, tag = 'input window, operand 1, single buffered']
    #allocation8 [shape = 's32[1]{0}', space=sflag, size = 0x4, scoped, tag = 'scoped memory for tpu_custom_call.1']
    #allocation9 [shape = 'u8[16384]{0}', space=vmem, size = 0x4000, scoped, tag = 'input window, operand 2, single buffered']
    #allocation10 [shape = 'u8[16384]{0}', space=vmem, size = 0x4000, scoped, tag = 'input window, operand 4, single buffered']
    #allocation11 [shape = 's32[1]{0}', space=sflag, size = 0x4, scoped, tag = 'scoped memory for tpu_custom_call.1']
    #allocation12 [shape = 'u8[16384]{0}', space=vmem, size = 0x4000, scoped, tag = 'input window, operand 5, single buffered']
    #allocation13 [shape = 'u8[8192]{0}', space=vmem, size = 0x2000, scoped, tag = 'output window, operand 0, single buffered']
    #allocation14 [shape = 'u8[2048]{0}', space=vmem, size = 0x800, scoped, tag = 'output window, operand 1, single buffered']
    #allocation15 [shape = 's32[1]{0}', space=sflag, size = 0x4, scoped, tag = 'scoped memory for tpu_custom_call.1']
    #allocation16 [shape = 'u8[2048]{0}', space=vmem, size = 0x800, scoped, tag = 'output window, operand 2, single buffered']
    %17 = vsyncpa [#allocation5], 0
    %18 = vsyncpa [#allocation8], 0
    %19 = vsyncpa [#allocation11], 0
    %20 = vsyncpa [#allocation6], 0
    %21 = vsyncpa [#allocation15], 0
    // Predicated region
    $region2: #{tpu_custom_call.1} parent=1 // pred_check
      _
    $region3: #{tpu_custom_call.1} parent=1 // pred_check_branch
      %23 = sbr.rel (0) target = $region5
    $region4: #{tpu_custom_call.1} parent=1 // pred_region
      %s25 = ssub.s32 256, 256
      %26 = vsyncadd [#allocation5], %s25
      %s27 = sshll.u32 [#allocation4], 4
      %s28 = int_to_ptr.vmem [resolvable:$true] %s27
      %33 = dma.hbm_to_vmem [thread:$0]  %s0, 256, %s28, [#allocation5], 32, 32, 2
    $region5: #{tpu_custom_call.1} parent=1 // pred_fallthru
      _
    // Predicated region
    $region6: #{tpu_custom_call.1} parent=1 // pred_check
      _
    $region7: #{tpu_custom_call.1} parent=1 // pred_check_branch
      %35 = sbr.rel (0) target = $region9
    $region8: #{tpu_custom_call.1} parent=1 // pred_region
      %s37 = ssub.s32 128, 128
      %38 = vsyncadd [#allocation8], %s37
      %s40 = sshll.u32 [#allocation7], 4
      %s41 = int_to_ptr.vmem [resolvable:$true] %s40
      %43 = dma.hbm_to_vmem [thread:$0]  %s1, 128, %s41, [#allocation8]
    $region9: #{tpu_custom_call.1} parent=1 // pred_fallthru
      _
    // Predicated region
    $region10: #{tpu_custom_call.1} parent=1 // pred_check
      _
    $region11: #{tpu_custom_call.1} parent=1 // pred_check_branch
      %45 = sbr.rel (0) target = $region13
    $region12: #{tpu_custom_call.1} parent=1 // pred_region
      %s47 = ssub.s32 512, 512
      %48 = vsyncadd [#allocation8], %s47
      %s49 = sshll.u32 [#allocation9], 4
      %s50 = int_to_ptr.vmem [resolvable:$true] %s49
      %55 = dma.hbm_to_vmem [thread:$0]  %s2, 512, %s50, [#allocation8], 128, 128, 8
    $region13: #{tpu_custom_call.1} parent=1 // pred_fallthru
      _
    // Predicated region
    $region14: #{tpu_custom_call.1} parent=1 // pred_check
      _
    $region15: #{tpu_custom_call.1} parent=1 // pred_check_branch
      %57 = sbr.rel (0) target = $region17
    $region16: #{tpu_custom_call.1} parent=1 // pred_region
      _
    $region17: #{tpu_custom_call.1} parent=1 // pred_fallthru
      _
    // Predicated region
    $region18: #{tpu_custom_call.1} parent=1 // pred_check
      _
    $region19: #{tpu_custom_call.1} parent=1 // pred_check_branch
      %59 = sbr.rel (0) target = $region21
    $region20: #{tpu_custom_call.1} parent=1 // pred_region
      %s61 = ssub.s32 512, 512
      %62 = vsyncadd [#allocation11], %s61
      %s63 = sshll.u32 [#allocation10], 4
      %s64 = int_to_ptr.vmem [resolvable:$true] %s63
      %69 = dma.hbm_to_vmem [thread:$0]  %s4, 512, %s64, [#allocation11], 128, 128, 8
    $region21: #{tpu_custom_call.1} parent=1 // pred_fallthru
      _
    // Predicated region
    $region22: #{tpu_custom_call.1} parent=1 // pred_check
      _
    $region23: #{tpu_custom_call.1} parent=1 // pred_check_branch
      %71 = sbr.rel (0) target = $region25
    $region24: #{tpu_custom_call.1} parent=1 // pred_region
      %s73 = ssub.s32 512, 512
      %74 = vsyncadd [#allocation11], %s73
      %s75 = sshll.u32 [#allocation12], 4
      %s76 = int_to_ptr.vmem [resolvable:$true] %s75
      %81 = dma.hbm_to_vmem [thread:$0]  %s5, 512, %s76, [#allocation11], 128, 128, 8
    $region25: #{tpu_custom_call.1} parent=1 // pred_fallthru
      _
    // Predicated region
    $region26: #{tpu_custom_call.1} parent=1 // pred_check
      _
    $region27: #{tpu_custom_call.1} parent=1 // pred_check_branch
      %83 = sbr.rel (0) target = $region29
    $region28: #{tpu_custom_call.1} parent=1 // pred_region
      _
    $region29: #{tpu_custom_call.1} parent=1 // pred_fallthru
      _
    // Predicated region
    $region30: #{tpu_custom_call.1} parent=1 // pred_check
      _
    $region31: #{tpu_custom_call.1} parent=1 // pred_check_branch
      %85 = sbr.rel (0) target = $region33
    $region32: #{tpu_custom_call.1} parent=1 // pred_region
      _
    $region33: #{tpu_custom_call.1} parent=1 // pred_fallthru
      _
    // Predicated region
    $region34: #{tpu_custom_call.1} parent=1 // pred_check
      _
    $region35: #{tpu_custom_call.1} parent=1 // pred_check_branch
      %87 = sbr.rel (0) target = $region37
    $region36: #{tpu_custom_call.1} parent=1 // pred_region
      _
    $region37: #{tpu_custom_call.1} parent=1 // pred_fallthru
      _
    // Predicated region
    $region38: #{tpu_custom_call.1} parent=1 // pred_check
      _
    $region39: #{tpu_custom_call.1} parent=1 // pred_check_branch
      %89 = sbr.rel (0) target = $region41
    $region40: #{tpu_custom_call.1} parent=1 // pred_region
      %90 = dma.done [#allocation5], 256
    $region41: #{tpu_custom_call.1} parent=1 // pred_fallthru
      _
    // Predicated region
    $region42: #{tpu_custom_call.1} parent=1 // pred_check
      _
    $region43: #{tpu_custom_call.1} parent=1 // pred_check_branch
      %92 = sbr.rel (0) target = $region45
    $region44: #{tpu_custom_call.1} parent=1 // pred_region
      %93 = dma.done [#allocation8], 128
    $region45: #{tpu_custom_call.1} parent=1 // pred_fallthru
      _
    // Predicated region
    $region46: #{tpu_custom_call.1} parent=1 // pred_check
      _
    $region47: #{tpu_custom_call.1} parent=1 // pred_check_branch
      %95 = sbr.rel (0) target = $region49
    $region48: #{tpu_custom_call.1} parent=1 // pred_region
      %96 = dma.done [#allocation8], 512
    $region49: #{tpu_custom_call.1} parent=1 // pred_fallthru
      _
    // Predicated region
    $region50: #{tpu_custom_call.1} parent=1 // pred_check
      _
    $region51: #{tpu_custom_call.1} parent=1 // pred_check_branch
      %98 = sbr.rel (0) target = $region53
    $region52: #{tpu_custom_call.1} parent=1 // pred_region
      %99 = dma.done [#allocation11], 512
    $region53: #{tpu_custom_call.1} parent=1 // pred_fallthru
      _
    // Predicated region
    $region54: #{tpu_custom_call.1} parent=1 // pred_check
      _
    $region55: #{tpu_custom_call.1} parent=1 // pred_check_branch
      %101 = sbr.rel (0) target = $region57
    $region56: #{tpu_custom_call.1} parent=1 // pred_region
      %102 = dma.done [#allocation11], 512
    $region57: #{tpu_custom_call.1} parent=1 // pred_fallthru
      _
    %p103 = scmp.eq.s32.totalorder 0, 0
    // Predicated region
    $region58: #{tpu_custom_call.1} parent=1 // pred_check
      %p104 = pneg %p103
    $region59: #{tpu_custom_call.1} parent=1 // pred_check_branch
      %106 = sbr.rel (%p104) target = $region61
    $region60: #{tpu_custom_call.1} parent=1 // pred_region
      %v107 = vld [vmem:[%s7] sm:$0x3]
      %v108 = vld [vmem:[%s7 + $0x2] sm:$0x3]
      %vm109 = vcmask 254976
      %110 = vst.msk [vmem:[#allocation2] sm:$0x3] %vm109, %v107
      %111 = vst.msk [vmem:[#allocation2 + $0x2] sm:$0x3] %vm109, %v108
      %v112 = vld [vmem:[%s8] sm:$0x3]
      %v113 = vld [vmem:[%s8 + $0x2] sm:$0x3]
      %114 = vst.msk [vmem:[#allocation3] sm:$0x3] %vm109, %v112
      %115 = vst.msk [vmem:[#allocation3 + $0x2] sm:$0x3] %vm109, %v113
    $region61: #{tpu_custom_call.1} parent=1 // pred_fallthru
      _
    loop: start=0, step=1, limit=8
    $region62: #{tpu_custom_call.1} parent=1 // loop_pre_header
      _
    $region63: #{tpu_custom_call.1} parent=1 // loop_header
      %s117 = sphi 0, %s121
      %p118 = scmp.ge.s32.totalorder %s117, 8
    $region64: #{tpu_custom_call.1} parent=1 // loop_header_branch
      %120 = sbr.rel (%p118) target = $region68
    $region65: #{tpu_custom_call.1} parent=1 // loop_body
      %s122 = smul.u32 %s117, 2
      %s123 = scalar_lea.vmem [#allocation4], %s122
      %v124 = vld [vmem:[%s123] sm:$0x3]
      %v125 = vld [vmem:[#allocation2] sm:$0x3]
      %v126 = vld [vmem:[#allocation3] sm:$0x3]
      %v127 = vld [vmem:[#allocation7] sm:$0xff]
      %v128 = vld [vmem:[#allocation9] sm:$0xff]
      %v129 = vld [vmem:[#allocation9 + $0x8] sm:$0xff]
      %v130 = vld [vmem:[#allocation9 + $0x10] sm:$0xff]
      %v131 = vld [vmem:[#allocation9 + $0x18] sm:$0xff]
      %v132 = vld [vmem:[%s3] sm:$0x1]
      %vm133 = vcmask 261120
      %v135 = vsel %vm133, %v125, 0
      %137 = vmatprep.subr.mxu0 0.0
      %138 = vmatpush1.msra.mxu0 0.0
      %139 = vmatprep.subr.mxu0 0.0
      %140 = vmatpush1.msra.mxu0 0.0
      %141 = vmatprep.subr.mxu0 0.0
      %142 = vmatpush1.msra.mxu0 0.0
      %143 = vmatprep.subr.mxu0 0.0
      %144 = vmatpush1.msra.mxu0 0.0
      %145 = vmatprep.subr.mxu0 0.0
      %146 = vmatpush1.msra.mxu0 0.0
      %147 = vmatprep.subr.mxu0 0.0
      %148 = vmatpush1.msra.mxu0 0.0
      %149 = vmatprep.subr.mxu0 0.0
      %150 = vmatpush1.msra.mxu0 0.0
      %151 = vmatprep.subr.mxu0 0.0
      %152 = vmatpush1.msra.mxu0 0.0
      %153 = vmatprep.subr.mxu0 0.0
      %154 = vmatpush1.msra.mxu0 0.0
      %155 = vmatprep.subr.mxu0 0.0
      %156 = vmatpush1.msra.mxu0 0.0
      %157 = vmatprep.subr.mxu0 0.0
      %158 = vmatpush1.msra.mxu0 0.0
      %159 = vmatprep.subr.mxu0 0.0
      %160 = vmatpush1.msra.mxu0 0.0
      %161 = vmatprep.subr.mxu0 0.0
      %162 = vmatpush1.msra.mxu0 %v131
      %163 = vmatprep.subr.mxu0 0.0
      %164 = vmatpush1.msra.mxu0 %v130
      %165 = vmatprep.subr.mxu0 0.0
      %166 = vmatpush1.msra.mxu0 %v129
      %167 = vmatprep.subr.mxu0 0.0
      %168 = vmatpush1.msra.mxu0 %v128
      %169 = vmatprep.subr.mxu0 0.0
      %170 = vmatpush2.msra.mxu0 0.0
      %171 = vmatprep.subr.mxu0 0.0
      %172 = vmatpush2.msra.mxu0 0.0
      %173 = vmatprep.subr.mxu0 0.0
      %174 = vmatpush2.msra.mxu0 0.0
      %175 = vmatprep.subr.mxu0 0.0
      %176 = vmatpush2.msra.mxu0 0.0
      %177 = vmatprep.subr.mxu0 0.0
      %178 = vmatpush2.msra.mxu0 0.0
      %179 = vmatprep.subr.mxu0 0.0
      %180 = vmatpush2.msra.mxu0 0.0
      %181 = vmatprep.subr.mxu0 0.0
      %182 = vmatpush2.msra.mxu0 0.0
      %183 = vmatprep.subr.mxu0 0.0
      %184 = vmatpush2.msra.mxu0 0.0
      %185 = vmatprep.subr.mxu0 0.0
      %186 = vmatpush2.msra.mxu0 0.0
      %187 = vmatprep.subr.mxu0 0.0
      %188 = vmatpush2.msra.mxu0 0.0
      %189 = vmatprep.subr.mxu0 0.0
      %190 = vmatpush2.msra.mxu0 0.0
      %191 = vmatprep.subr.mxu0 0.0
      %192 = vmatpush2.msra.mxu0 0.0
      %193 = vmatprep.subr.mxu0 0.0
      %194 = vmatpush2.msra.mxu0 0.0
      %195 = vmatprep.subr.mxu0 0.0
      %196 = vmatpush2.msra.mxu0 0.0
      %197 = vmatprep.subr.mxu0 0.0
      %198 = vmatpush2.msra.mxu0 0.0
      %199 = vmatprep.subr.mxu0 0.0
      %200 = vmatpush2.msra.mxu0 0.0
      %201 = vmatprep.mubr.f32.mxu0 0.0
      %202 = vmatmul.mubr.f32.gmra.mxu0 %v135
      %v203 = vpop.f32.mrf.mxu0
      %v204 = vadd.f32 0.0, %v203
      %v205 = vpop.f32.mrf.mxu0
      %206 = vdwg.mxu0
      %vm207 = vcmask 64512
      %v209 = vsel %vm207, %v124, 0
      %211 = vmatprep.subr.mxu0 0.0
      %212 = vmatpush1.msra.mxu0 0.0
      %213 = vmatprep.subr.mxu0 0.0
      %214 = vmatpush1.msra.mxu0 0.0
      %215 = vmatprep.subr.mxu0 0.0
      %216 = vmatpush1.msra.mxu0 0.0
      %217 = vmatprep.subr.mxu0 0.0
      %218 = vmatpush1.msra.mxu0 0.0
      %219 = vmatprep.subr.mxu0 0.0
      %220 = vmatpush1.msra.mxu0 0.0
      %221 = vmatprep.subr.mxu0 0.0
      %222 = vmatpush1.msra.mxu0 0.0
      %223 = vmatprep.subr.mxu0 0.0
      %224 = vmatpush1.msra.mxu0 0.0
      %225 = vmatprep.subr.mxu0 0.0
      %226 = vmatpush1.msra.mxu0 0.0
      %227 = vmatprep.subr.mxu0 0.0
      %228 = vmatpush1.msra.mxu0 0.0
      %229 = vmatprep.subr.mxu0 0.0
      %230 = vmatpush1.msra.mxu0 0.0
      %231 = vmatprep.subr.mxu0 0.0
      %232 = vmatpush1.msra.mxu0 0.0
      %233 = vmatprep.subr.mxu0 0.0
      %234 = vmatpush1.msra.mxu0 0.0
      %235 = vmatprep.subr.mxu0 0.0
      %236 = vmatpush1.msra.mxu0 0.0
      %237 = vmatprep.subr.mxu0 0.0
      %238 = vmatpush1.msra.mxu0 0.0
      %239 = vmatprep.subr.mxu0 0.0
      %240 = vmatpush1.msra.mxu0 0.0
      %241 = vmatprep.subr.mxu0 0.0
      %242 = vmatpush1.msra.mxu0 %v127
      %243 = vmatprep.subr.mxu0 0.0
      %244 = vmatpush2.msra.mxu0 0.0
      %245 = vmatprep.subr.mxu0 0.0
      %246 = vmatpush2.msra.mxu0 0.0
      %247 = vmatprep.subr.mxu0 0.0
      %248 = vmatpush2.msra.mxu0 0.0
      %249 = vmatprep.subr.mxu0 0.0
      %250 = vmatpush2.msra.mxu0 0.0
      %251 = vmatprep.subr.mxu0 0.0
      %252 = vmatpush2.msra.mxu0 0.0
      %253 = vmatprep.subr.mxu0 0.0
      %254 = vmatpush2.msra.mxu0 0.0
      %255 = vmatprep.subr.mxu0 0.0
      %256 = vmatpush2.msra.mxu0 0.0
      %257 = vmatprep.subr.mxu0 0.0
      %258 = vmatpush2.msra.mxu0 0.0
      %259 = vmatprep.subr.mxu0 0.0
      %260 = vmatpush2.msra.mxu0 0.0
      %261 = vmatprep.subr.mxu0 0.0
      %262 = vmatpush2.msra.mxu0 0.0
      %263 = vmatprep.subr.mxu0 0.0
      %264 = vmatpush2.msra.mxu0 0.0
      %265 = vmatprep.subr.mxu0 0.0
      %266 = vmatpush2.msra.mxu0 0.0
      %267 = vmatprep.subr.mxu0 0.0
      %268 = vmatpush2.msra.mxu0 0.0
      %269 = vmatprep.subr.mxu0 0.0
      %270 = vmatpush2.msra.mxu0 0.0
      %271 = vmatprep.subr.mxu0 0.0
      %272 = vmatpush2.msra.mxu0 0.0
      %273 = vmatprep.subr.mxu0 0.0
      %274 = vmatpush2.msra.mxu0 0.0
      %275 = vmatprep.mubr.f32.mxu0 0.0
      %276 = vmatmul.mubr.f32.gmra.mxu0 %v209
      %v277 = vpop.f32.mrf.mxu0
      %v278 = vadd.f32 %v204, %v277
      %v279 = vpop.f32.mrf.mxu0
      %280 = vdwg.mxu0
      %v282 = vlaneseq
      %v283 = vshrl.u32 %v282, 7
      %v284 = vsub.s32 0, %v283
      %v285 = vrot.slane %v132, %v284
      %v287 = vadd.f32 %v278, %v285
      %v288 = vxor.u32 %v287, 2147483648
      %v289 = vmul.f32 %v288, 1.442695
      %v290 = vpow.pop %v289
      %v291 = vadd.f32 %v290, 1.0
      %v292 = vrcp.pop %v291
      %v293 = vmul.f32 1.0, %v292
      %v294 = vtanh.pop %v287
      %296 = vrot.lane.b32.xlu0 %v126, 32
      %v297 = vpop.permute.xlu0 %296
      %v299 = vmul.f32 %v293, %v297
      %301 = vrot.lane.b32.xlu0 %v294, 32
      %v302 = vpop.permute.xlu0 %301
      %v304 = vmul.f32 %v293, %v302
      %306 = vrot.lane.b32.xlu0 %v304, 32
      %v307 = vpop.permute.xlu0 %306
      %v309 = vadd.f32 %v299, %v307
      %v310 = vtanh.pop %v309
      %312 = vrot.lane.b32.xlu0 %v310, 32
      %v313 = vpop.permute.xlu0 %312
      %v315 = vmul.f32 %v293, %v313
      %317 = vrot.lane.b32.xlu0 %v315, 64
      %v318 = vpop.permute.xlu0 %317
      %vm320 = vcmask 254976
      %321 = vst.msk [vmem:[#allocation2] sm:$0x3] %vm320, %v318
      %323 = vrot.lane.b32.xlu0 %v309, 96
      %v324 = vpop.permute.xlu0 %323
      %326 = vst.msk [vmem:[#allocation3] sm:$0x3] %vm320, %v324
      %s327 = scalar_lea.vmem [#allocation2], 2
      %v328 = vld [vmem:[%s327] sm:$0x3]
      %s329 = scalar_lea.vmem [#allocation3], 2
      %v330 = vld [vmem:[%s329] sm:$0x3]
      %v331 = vld [vmem:[#allocation10] sm:$0xff]
      %v332 = vld [vmem:[#allocation10 + $0x8] sm:$0xff]
      %v333 = vld [vmem:[#allocation10 + $0x10] sm:$0xff]
      %v334 = vld [vmem:[#allocation10 + $0x18] sm:$0xff]
      %v335 = vld [vmem:[#allocation12] sm:$0xff]
      %v336 = vld [vmem:[#allocation12 + $0x8] sm:$0xff]
      %v337 = vld [vmem:[#allocation12 + $0x10] sm:$0xff]
      %v338 = vld [vmem:[#allocation12 + $0x18] sm:$0xff]
      %v339 = vld [vmem:[%s6] sm:$0x1]
      %v341 = vsel %vm133, %v328, 0
      %343 = vmatprep.subr.mxu0 0.0
      %344 = vmatpush1.msra.mxu0 0.0
      %345 = vmatprep.subr.mxu0 0.0
      %346 = vmatpush1.msra.mxu0 0.0
      %347 = vmatprep.subr.mxu0 0.0
      %348 = vmatpush1.msra.mxu0 0.0
      %349 = vmatprep.subr.mxu0 0.0
      %350 = vmatpush1.msra.mxu0 0.0
      %351 = vmatprep.subr.mxu0 0.0
      %352 = vmatpush1.msra.mxu0 0.0
      %353 = vmatprep.subr.mxu0 0.0
      %354 = vmatpush1.msra.mxu0 0.0
      %355 = vmatprep.subr.mxu0 0.0
      %356 = vmatpush1.msra.mxu0 0.0
      %357 = vmatprep.subr.mxu0 0.0
      %358 = vmatpush1.msra.mxu0 0.0
      %359 = vmatprep.subr.mxu0 0.0
      %360 = vmatpush1.msra.mxu0 0.0
      %361 = vmatprep.subr.mxu0 0.0
      %362 = vmatpush1.msra.mxu0 0.0
      %363 = vmatprep.subr.mxu0 0.0
      %364 = vmatpush1.msra.mxu0 0.0
      %365 = vmatprep.subr.mxu0 0.0
      %366 = vmatpush1.msra.mxu0 0.0
      %367 = vmatprep.subr.mxu0 0.0
      %368 = vmatpush1.msra.mxu0 %v338
      %369 = vmatprep.subr.mxu0 0.0
      %370 = vmatpush1.msra.mxu0 %v337
      %371 = vmatprep.subr.mxu0 0.0
      %372 = vmatpush1.msra.mxu0 %v336
      %373 = vmatprep.subr.mxu0 0.0
      %374 = vmatpush1.msra.mxu0 %v335
      %375 = vmatprep.subr.mxu0 0.0
      %376 = vmatpush2.msra.mxu0 0.0
      %377 = vmatprep.subr.mxu0 0.0
      %378 = vmatpush2.msra.mxu0 0.0
      %379 = vmatprep.subr.mxu0 0.0
      %380 = vmatpush2.msra.mxu0 0.0
      %381 = vmatprep.subr.mxu0 0.0
      %382 = vmatpush2.msra.mxu0 0.0
      %383 = vmatprep.subr.mxu0 0.0
      %384 = vmatpush2.msra.mxu0 0.0
      %385 = vmatprep.subr.mxu0 0.0
      %386 = vmatpush2.msra.mxu0 0.0
      %387 = vmatprep.subr.mxu0 0.0
      %388 = vmatpush2.msra.mxu0 0.0
      %389 = vmatprep.subr.mxu0 0.0
      %390 = vmatpush2.msra.mxu0 0.0
      %391 = vmatprep.subr.mxu0 0.0
      %392 = vmatpush2.msra.mxu0 0.0
      %393 = vmatprep.subr.mxu0 0.0
      %394 = vmatpush2.msra.mxu0 0.0
      %395 = vmatprep.subr.mxu0 0.0
      %396 = vmatpush2.msra.mxu0 0.0
      %397 = vmatprep.subr.mxu0 0.0
      %398 = vmatpush2.msra.mxu0 0.0
      %399 = vmatprep.subr.mxu0 0.0
      %400 = vmatpush2.msra.mxu0 0.0
      %401 = vmatprep.subr.mxu0 0.0
      %402 = vmatpush2.msra.mxu0 0.0
      %403 = vmatprep.subr.mxu0 0.0
      %404 = vmatpush2.msra.mxu0 0.0
      %405 = vmatprep.subr.mxu0 0.0
      %406 = vmatpush2.msra.mxu0 0.0
      %407 = vmatprep.mubr.f32.mxu0 0.0
      %408 = vmatmul.mubr.f32.gmra.mxu0 %v341
      %v409 = vpop.f32.mrf.mxu0
      %v410 = vadd.f32 0.0, %v409
      %v411 = vpop.f32.mrf.mxu0
      %412 = vdwg.mxu0
      %v413 = vsel %vm133, %v318, 0
      %415 = vmatprep.subr.mxu0 0.0
      %416 = vmatpush1.msra.mxu0 0.0
      %417 = vmatprep.subr.mxu0 0.0
      %418 = vmatpush1.msra.mxu0 0.0
      %419 = vmatprep.subr.mxu0 0.0
      %420 = vmatpush1.msra.mxu0 0.0
      %421 = vmatprep.subr.mxu0 0.0
      %422 = vmatpush1.msra.mxu0 0.0
      %423 = vmatprep.subr.mxu0 0.0
      %424 = vmatpush1.msra.mxu0 0.0
      %425 = vmatprep.subr.mxu0 0.0
      %426 = vmatpush1.msra.mxu0 0.0
      %427 = vmatprep.subr.mxu0 0.0
      %428 = vmatpush1.msra.mxu0 0.0
      %429 = vmatprep.subr.mxu0 0.0
      %430 = vmatpush1.msra.mxu0 0.0
      %431 = vmatprep.subr.mxu0 0.0
      %432 = vmatpush1.msra.mxu0 0.0
      %433 = vmatprep.subr.mxu0 0.0
      %434 = vmatpush1.msra.mxu0 0.0
      %435 = vmatprep.subr.mxu0 0.0
      %436 = vmatpush1.msra.mxu0 0.0
      %437 = vmatprep.subr.mxu0 0.0
      %438 = vmatpush1.msra.mxu0 0.0
      %439 = vmatprep.subr.mxu0 0.0
      %440 = vmatpush1.msra.mxu0 %v334
      %441 = vmatprep.subr.mxu0 0.0
      %442 = vmatpush1.msra.mxu0 %v333
      %443 = vmatprep.subr.mxu0 0.0
      %444 = vmatpush1.msra.mxu0 %v332
      %445 = vmatprep.subr.mxu0 0.0
      %446 = vmatpush1.msra.mxu0 %v331
      %447 = vmatprep.subr.mxu0 0.0
      %448 = vmatpush2.msra.mxu0 0.0
      %449 = vmatprep.subr.mxu0 0.0
      %450 = vmatpush2.msra.mxu0 0.0
      %451 = vmatprep.subr.mxu0 0.0
      %452 = vmatpush2.msra.mxu0 0.0
      %453 = vmatprep.subr.mxu0 0.0
      %454 = vmatpush2.msra.mxu0 0.0
      %455 = vmatprep.subr.mxu0 0.0
      %456 = vmatpush2.msra.mxu0 0.0
      %457 = vmatprep.subr.mxu0 0.0
      %458 = vmatpush2.msra.mxu0 0.0
      %459 = vmatprep.subr.mxu0 0.0
      %460 = vmatpush2.msra.mxu0 0.0
      %461 = vmatprep.subr.mxu0 0.0
      %462 = vmatpush2.msra.mxu0 0.0
      %463 = vmatprep.subr.mxu0 0.0
      %464 = vmatpush2.msra.mxu0 0.0
      %465 = vmatprep.subr.mxu0 0.0
      %466 = vmatpush2.msra.mxu0 0.0
      %467 = vmatprep.subr.mxu0 0.0
      %468 = vmatpush2.msra.mxu0 0.0
      %469 = vmatprep.subr.mxu0 0.0
      %470 = vmatpush2.msra.mxu0 0.0
      %471 = vmatprep.subr.mxu0 0.0
      %472 = vmatpush2.msra.mxu0 0.0
      %473 = vmatprep.subr.mxu0 0.0
      %474 = vmatpush2.msra.mxu0 0.0
      %475 = vmatprep.subr.mxu0 0.0
      %476 = vmatpush2.msra.mxu0 0.0
      %477 = vmatprep.subr.mxu0 0.0
      %478 = vmatpush2.msra.mxu0 0.0
      %479 = vmatprep.mubr.f32.mxu0 0.0
      %480 = vmatmul.mubr.f32.gmra.mxu0 %v413
      %v481 = vpop.f32.mrf.mxu0
      %v482 = vadd.f32 %v410, %v481
      %v483 = vpop.f32.mrf.mxu0
      %484 = vdwg.mxu0
      %v486 = vlaneseq
      %v487 = vshrl.u32 %v486, 7
      %v488 = vsub.s32 0, %v487
      %v489 = vrot.slane %v339, %v488
      %v491 = vadd.f32 %v482, %v489
      %v492 = vxor.u32 %v491, 2147483648
      %v493 = vmul.f32 %v492, 1.442695
      %v494 = vpow.pop %v493
      %v495 = vadd.f32 %v494, 1.0
      %v496 = vrcp.pop %v495
      %v497 = vmul.f32 1.0, %v496
      %v498 = vtanh.pop %v491
      %500 = vrot.lane.b32.xlu0 %v330, 32
      %v501 = vpop.permute.xlu0 %500
      %v503 = vmul.f32 %v497, %v501
      %505 = vrot.lane.b32.xlu0 %v498, 32
      %v506 = vpop.permute.xlu0 %505
      %v508 = vmul.f32 %v497, %v506
      %510 = vrot.lane.b32.xlu0 %v508, 32
      %v511 = vpop.permute.xlu0 %510
      %v513 = vadd.f32 %v503, %v511
      %v514 = vtanh.pop %v513
      %516 = vrot.lane.b32.xlu0 %v514, 32
      %v517 = vpop.permute.xlu0 %516
      %v519 = vmul.f32 %v497, %v517
      %521 = vrot.lane.b32.xlu0 %v519, 64
      %v522 = vpop.permute.xlu0 %521
      %524 = vst.msk [vmem:[%s327] sm:$0x3] %vm320, %v522
      %526 = vrot.lane.b32.xlu0 %v513, 96
      %v527 = vpop.permute.xlu0 %526
      %529 = vst.msk [vmem:[%s329] sm:$0x3] %vm320, %v527
      %s530 = scalar_lea.vmem [#allocation13], %s122
      %531 = vst.msk [vmem:[%s530] sm:$0x3] %vm320, %v522
    $region66: #{tpu_custom_call.1} parent=1 // loop_footer
      %s121 = sadd.s32 1, %s117
    $region67: #{tpu_custom_call.1} parent=1 // loop_footer_branch
      %116 = sbr.rel target = $region63
    $region68: #{tpu_custom_call.1} parent=1 // loop_exit
      _
    // Predicated region
    $region69: #{tpu_custom_call.1} parent=1 // pred_check
      %p532 = pneg %p103
    $region70: #{tpu_custom_call.1} parent=1 // pred_check_branch
      %534 = sbr.rel (%p532) target = $region72
    $region71: #{tpu_custom_call.1} parent=1 // pred_region
      %v535 = vld [vmem:[#allocation2] sm:$0x3]
      %v536 = vld [vmem:[#allocation2 + $0x2] sm:$0x3]
      %vm537 = vcmask 254976
      %538 = vst.msk [vmem:[#allocation14] sm:$0x3] %vm537, %v535
      %539 = vst.msk [vmem:[#allocation14 + $0x2] sm:$0x3] %vm537, %v536
      %v540 = vld [vmem:[#allocation3] sm:$0x3]
      %v541 = vld [vmem:[#allocation3 + $0x2] sm:$0x3]
      %542 = vst.msk [vmem:[#allocation16] sm:$0x3] %vm537, %v540
      %543 = vst.msk [vmem:[#allocation16 + $0x2] sm:$0x3] %vm537, %v541
    $region72: #{tpu_custom_call.1} parent=1 // pred_fallthru
      _
    // Predicated region
    $region73: #{tpu_custom_call.1} parent=1 // pred_check
      _
    $region74: #{tpu_custom_call.1} parent=1 // pred_check_branch
      %545 = sbr.rel (0) target = $region76
    $region75: #{tpu_custom_call.1} parent=1 // pred_region
      %s547 = ssub.s32 256, 256
      %548 = vsyncadd [#allocation6], %s547
      %s549 = sshll.u32 [#allocation13], 4
      %s550 = int_to_ptr.vmem [resolvable:$true] %s549
      %555 = dma.vmem_to_hbm [thread:$0]  %s550, 256, %s9, [#allocation6], 32, 32, 2
    $region76: #{tpu_custom_call.1} parent=1 // pred_fallthru
      _
    // Predicated region
    $region77: #{tpu_custom_call.1} parent=1 // pred_check
      _
    $region78: #{tpu_custom_call.1} parent=1 // pred_check_branch
      %557 = sbr.rel (0) target = $region80
    $region79: #{tpu_custom_call.1} parent=1 // pred_region
      %s559 = ssub.s32 64, 64
      %560 = vsyncadd [#allocation15], %s559
      %s561 = sshll.u32 [#allocation14], 4
      %s562 = int_to_ptr.vmem [resolvable:$true] %s561
      %567 = dma.vmem_to_hbm [thread:$0]  %s562, 64, %s10, [#allocation15], 32, 32, 2
    $region80: #{tpu_custom_call.1} parent=1 // pred_fallthru
      _
    // Predicated region
    $region81: #{tpu_custom_call.1} parent=1 // pred_check
      _
    $region82: #{tpu_custom_call.1} parent=1 // pred_check_branch
      %569 = sbr.rel (0) target = $region84
    $region83: #{tpu_custom_call.1} parent=1 // pred_region
      %s571 = ssub.s32 64, 64
      %572 = vsyncadd [#allocation15], %s571
      %s573 = sshll.u32 [#allocation16], 4
      %s574 = int_to_ptr.vmem [resolvable:$true] %s573
      %579 = dma.vmem_to_hbm [thread:$0]  %s574, 64, %s11, [#allocation15], 32, 32, 2
    $region84: #{tpu_custom_call.1} parent=1 // pred_fallthru
      _
    // Predicated region
    $region85: #{tpu_custom_call.1} parent=1 // pred_check
      _
    $region86: #{tpu_custom_call.1} parent=1 // pred_check_branch
      %581 = sbr.rel (0) target = $region88
    $region87: #{tpu_custom_call.1} parent=1 // pred_region
      %582 = dma.done [#allocation6], 256
    $region88: #{tpu_custom_call.1} parent=1 // pred_fallthru
      _
    // Predicated region
    $region89: #{tpu_custom_call.1} parent=1 // pred_check
      _
    $region90: #{tpu_custom_call.1} parent=1 // pred_check_branch
      %584 = sbr.rel (0) target = $region92
    $region91: #{tpu_custom_call.1} parent=1 // pred_region
      %585 = dma.done [#allocation15], 64
    $region92: #{tpu_custom_call.1} parent=1 // pred_fallthru
      _
    // Predicated region
    $region93: #{tpu_custom_call.1} parent=1 // pred_check
      _
    $region94: #{tpu_custom_call.1} parent=1 // pred_check_branch
      %587 = sbr.rel (0) target = $region96
    $region95: #{tpu_custom_call.1} parent=1 // pred_region
      %588 = dma.done [#allocation15], 64
    $region96: #{tpu_custom_call.1} parent=1 // pred_fallthru
      _
    %589 = vsyncpa [#allocation5], 1
    %590 = vsyncpa [#allocation8], 1
    %591 = vsyncpa [#allocation11], 1
    %592 = vsyncpa [#allocation6], 1
    %593 = vsyncpa [#allocation15], 1

</llo_original>
